<compile_context>
chip_gen: v7x
topology: tpu7x:2x2x1
jax: 0.10.0
libtpu: 0.0.40
codegen_flags: <defaults>
</compile_context>

<pallas_src>
import jax
import jax.numpy as jnp
from jax.experimental import pallas as pl
from jax.experimental.pallas import tpu as pltpu


_TARGET_BLOCK_BYTES = 4 << 20     # ~4 MiB x-blocks: 85%+ of HBM roofline territory
_MIN_GRID_STEPS = 8               # keep enough steps for megacore + pipeline overlap


# ---------------------------------------------------------------------------
# Fused kernel: pool + fc1/relu + fc2/sigmoid + apply, one batch-block / step.
# ---------------------------------------------------------------------------
def _se_fused_kernel(x_ref, w1_ref, b1_ref, w2_ref, b2_ref, o_ref):
    # x_ref: (TB, C, HW); HW sits on lanes (lane-dense loads/stores).
    hw = x_ref.shape[-1]
    inv_hw = 1.0 / hw

    # AdaptiveAvgPool2d([1,1]): global spatial mean -> one lane reduce per row.
    pooled = jnp.sum(x_ref[...], axis=-1) * inv_hw                        # (TB, C)

    # fc1 (C -> C//8) + ReLU as VPU broadcast-mul + XLU lane reduce (the FCs
    # are ~100x below one MXU tile; keep them off the MXU as free filler).
    hid = jnp.sum(pooled[:, None, :] * w1_ref[...][None, :, :], axis=-1)  # (TB, d8)
    hid = jnp.maximum(hid + b1_ref[...], 0.0)

    # fc2 (C//8 -> C) + Sigmoid, same structure (weights in native layout).
    gate = jnp.sum(hid[:, None, :] * w2_ref[...][None, :, :], axis=-1)    # (TB, C)
    gate = jax.nn.sigmoid(gate + b2_ref[...])

    # einsum('ijkl,ijkl->ijkl') + residual == x * (1 + gate).  Re-read x_ref
    # here (separate VMEM load) instead of reusing the value loaded for the
    # pooling, so the whole block never has to stay live across the gate math.
    o_ref[...] = x_ref[...] * (1.0 + gate[:, :, None])


# ---------------------------------------------------------------------------
# Apply-only kernel for the split (large-image) path: out = x * (1 + gate).
# ---------------------------------------------------------------------------
def _se_apply_kernel(gate_ref, x_ref, o_ref):
    # gate_ref: (C, 1); x_ref / o_ref: (C, T) — lane broadcast of a column.
    o_ref[...] = x_ref[...] * (1.0 + gate_ref[...])


# ---------------------------------------------------------------------------
# VMEM budgeting (per chip generation).
# ---------------------------------------------------------------------------
def _vmem_budget_bytes():
    try:
        cap = int(getattr(pltpu.get_tpu_info(), "vmem_capacity_bytes", 0))
    except Exception:
        cap = 0
    if cap <= 0:
        cap = 64 << 20            # conservative fallback: v7x per-TC physical VMEM
    # Leave a quarter of physical VMEM for double-buffered weight blocks and
    # Mosaic internal scratch: ~48 MiB on v7x, ~96 MiB on v5e / v6e.
    return max(8 << 20, (cap // 4) * 3)


def _round_down_128(x):
    return max(128, (x // 128) * 128)


# ---------------------------------------------------------------------------
# Wrappers.
# ---------------------------------------------------------------------------
def _se_fused(x3, w1, b1, w2, b2, *, usable, budget):
    N, C, HW = x3.shape
    d8 = w1.shape[0]
    itemsize = jnp.dtype(x3.dtype).itemsize
    per_image = C * HW * itemsize

    # Batch-block size: big enough to amortize grid overhead / saturate HBM,
    # small enough that 2 in + 2 out double-buffered blocks fit the budget,
    # shrunk again if it would collapse the grid below _MIN_GRID_STEPS.
    tb = max(1, min(N,
                    _TARGET_BLOCK_BYTES // per_image,
                    usable // (4 * per_image)))
    if pl.cdiv(N, tb) < _MIN_GRID_STEPS:
        tb = min(tb, max(1, pl.cdiv(N, _MIN_GRID_STEPS)))
    grid = (pl.cdiv(N, tb),)

    needed = 4 * tb * per_image + (2 << 20)          # x bufs + weights + scratch
    vmem_limit = int(min(budget, max(needed, 32 << 20)))

    b1r = b1.reshape(1, d8)
    b2r = b2.reshape(1, C)

    def const(shape):
        return pl.BlockSpec(shape, lambda i: (0,) * len(shape))

    return pl.pallas_call(
        _se_fused_kernel,
        out_shape=jax.ShapeDtypeStruct((N, C, HW), x3.dtype),
        grid=grid,
        in_specs=[
            pl.BlockSpec((tb, C, HW), lambda i: (i, 0, 0)),   # x batch-block
            const((d8, C)),      # fc1.weight (native torch layout)
            const((1, d8)),      # fc1.bias
            const((C, d8)),      # fc2.weight (native torch layout)
            const((1, C)),       # fc2.bias
        ],
        out_specs=pl.BlockSpec((tb, C, HW), lambda i: (i, 0, 0)),
        compiler_params=pltpu.CompilerParams(
            dimension_semantics=("parallel",),
            vmem_limit_bytes=vmem_limit),
    )(x3, w1, b1r, w2, b2r)


def _se_split(x3, w1, b1, w2, b2, *, usable, budget):
    """Large-image path: gate in plain XLA, elementwise apply tiled over HW."""
    N, C, HW = x3.shape
    itemsize = jnp.dtype(x3.dtype).itemsize

    # Gate (N, C) touches only N*C values after one pooling pass over x; this
    # costs one extra HBM read of x but removes the whole-image VMEM wall.
    pooled = jnp.mean(x3, axis=-1)
    hid = jnp.maximum(pooled @ w1.T + b1, 0.0)
    gate = jax.nn.sigmoid(hid @ w2.T + b2)
    gate3 = gate.reshape(N, C, 1).astype(x3.dtype)

    # Spatial tile: multiple of 128 lanes (unmasked vst), ~target bytes, and
    # 2 in + 2 out double-buffers within the per-generation VMEM budget.
    row_bytes = C * itemsize
    t = min(_round_down_128(_TARGET_BLOCK_BYTES // max(1, row_bytes)),
            _round_down_128(usable // max(1, 4 * row_bytes)))
    if t >= HW:
        t = HW                     # full extent (also covers HW < 128 / unaligned)
    grid = (N, pl.cdiv(HW, t))

    needed = 4 * C * t * itemsize + (2 << 20)
    vmem_limit = int(min(budget, max(needed, 32 << 20)))

    return pl.pallas_call(
        _se_apply_kernel,
        out_shape=jax.ShapeDtypeStruct((N, C, HW), x3.dtype),
        grid=grid,
        in_specs=[
            pl.BlockSpec((None, C, 1), lambda n, j: (n, 0, 0)),   # gate column
            pl.BlockSpec((None, C, t), lambda n, j: (n, 0, j)),   # x spatial tile
        ],
        out_specs=pl.BlockSpec((None, C, t), lambda n, j: (n, 0, j)),
        compiler_params=pltpu.CompilerParams(
            dimension_semantics=("parallel", "parallel"),
            vmem_limit_bytes=vmem_limit),
    )(gate3, x3)


def se_forward(x, w1, b1, w2, b2, *, force_split=False):
    """SE forward.  x: (N, C, H, W); w1: (d8, C); b1: (d8,); w2: (C, d8); b2: (C,)."""
    N, C, H, W = x.shape
    HW = H * W
    itemsize = jnp.dtype(x.dtype).itemsize

    x3 = x.reshape(N, C, HW)                 # lane-dense view (contiguous, free)
    budget = _vmem_budget_bytes()
    usable = max(1 << 20, budget - (2 << 20))
    per_image = C * HW * itemsize

    # Fused path needs one image x (2 in + 2 out double-buffers) in VMEM; if
    # that does not fit (large C*HW on v7x's 64 MiB), fall back to the split
    # gate-compute / gate-apply structure.
    if (4 * per_image <= usable) and not force_split:
        out3 = _se_fused(x3, w1, b1, w2, b2, usable=usable, budget=budget)
    else:
        out3 = _se_split(x3, w1, b1, w2, b2, usable=usable, budget=budget)
    return out3.reshape(N, C, H, W)


def se_reference(x, w1, b1, w2, b2):
    pooled = jnp.mean(x, axis=(2, 3))
    hid = jnp.maximum(pooled @ w1.T + b1, 0.0)
    gate = jax.nn.sigmoid(hid @ w2.T + b2)
    return x * (1.0 + gate[:, :, None, None])


if __name__ == "__main__":
    # d = 16 channels -> hidden = round(16 / 8) = 2, matching nn.Linear shapes.
    N, C, H, W = 2, 16, 16, 16
    d, d8 = C, round(C / 8)

    key = jax.random.PRNGKey(0)
    kx, k1, k2, k3, k4 = jax.random.split(key, 5)

    x = jax.random.normal(kx, (N, C, H, W), dtype=jnp.float32)
    # Deterministic synthetic parameters (shapes follow torch nn.Linear).
    w1 = jax.random.normal(k1, (d8, d), dtype=jnp.float32) * 0.1   # fc1.weight
    b1 = jax.random.normal(k2, (d8,), dtype=jnp.float32) * 0.1     # fc1.bias
    w2 = jax.random.normal(k3, (d, d8), dtype=jnp.float32) * 0.1   # fc2.weight
    b2 = jax.random.normal(k4, (d,), dtype=jnp.float32) * 0.1      # fc2.bias

    ref = se_reference(x, w1, b1, w2, b2)

    # Fused (default) path.
    out = jax.block_until_ready(se_forward(x, w1, b1, w2, b2))
    assert out.shape == (N, C, H, W)
    assert jnp.allclose(out, ref, atol=1e-5, rtol=1e-5)

    # Large-image split path (gate in XLA + tiled elementwise apply kernel).
    out_split = jax.block_until_ready(
        se_forward(x, w1, b1, w2, b2, force_split=True))
    assert jnp.allclose(out_split, ref, atol=1e-5, rtol=1e-5)

    print("KERNEL_OK")
</pallas_src>

<mosaic_0001>
module attributes {stable_mosaic.version = 11 : i64} {
  func.func @_se_fused_kernel(%arg0: i32, %arg1: memref<1x16x256xf32, #tpu.memory_space<vmem>>, %arg2: memref<2x16xf32, #tpu.memory_space<vmem>>, %arg3: memref<1x2xf32, #tpu.memory_space<vmem>>, %arg4: memref<16x2xf32, #tpu.memory_space<vmem>>, %arg5: memref<1x16xf32, #tpu.memory_space<vmem>>, %arg6: memref<1x16x256xf32, #tpu.memory_space<vmem>>) attributes {dimension_semantics = [#tpu.dimension_semantics<parallel>], iteration_bounds = array<i64: 2>, scalar_prefetch = 0 : i64, scratch_operands = 0 : i64, tpu.core_type = #tpu.core_type<tc>, window_params = [{transform_indices = @transform_0, window_bounds = array<i64: 1, 16, 256>}, {pipeline_mode = #tpu.pipeline_mode<synchronous>, transform_indices = @transform_1, window_bounds = array<i64: 2, 16>}, {pipeline_mode = #tpu.pipeline_mode<synchronous>, transform_indices = @transform_2, window_bounds = array<i64: 1, 2>}, {pipeline_mode = #tpu.pipeline_mode<synchronous>, transform_indices = @transform_3, window_bounds = array<i64: 16, 2>}, {pipeline_mode = #tpu.pipeline_mode<synchronous>, transform_indices = @transform_4, window_bounds = array<i64: 1, 16>}, {transform_indices = @transform_5, window_bounds = array<i64: 1, 16, 256>}]} {
    %c0 = arith.constant 0 : index
    %c0_0 = arith.constant 0 : index
    %c0_1 = arith.constant 0 : index
    %0 = vector.load %arg1[%c0, %c0_0, %c0_1] : memref<1x16x256xf32, #tpu.memory_space<vmem>>, vector<1x16x256xf32>
    %cst = arith.constant dense<0.000000e+00> : vector<1x16xf32>
    %1 = vector.multi_reduction <add>, %0, %cst [2] : vector<1x16x256xf32> to vector<1x16xf32>
    %cst_2 = arith.constant 3.906250e-03 : f32
    %2 = vector.broadcast %cst_2 : f32 to vector<1x16xf32>
    %3 = arith.mulf %1, %2 : vector<1x16xf32>
    %4 = vector.shape_cast %3 : vector<1x16xf32> to vector<1x1x16xf32>
    %c0_3 = arith.constant 0 : index
    %c0_4 = arith.constant 0 : index
    %5 = vector.load %arg2[%c0_3, %c0_4] : memref<2x16xf32, #tpu.memory_space<vmem>>, vector<2x16xf32>
    %6 = vector.shape_cast %5 : vector<2x16xf32> to vector<1x2x16xf32>
    %7 = vector.broadcast %4 : vector<1x1x16xf32> to vector<1x2x16xf32>
    %8 = arith.mulf %7, %6 : vector<1x2x16xf32>
    %cst_5 = arith.constant dense<0.000000e+00> : vector<1x2xf32>
    %9 = vector.multi_reduction <add>, %8, %cst_5 [2] : vector<1x2x16xf32> to vector<1x2xf32>
    %c0_6 = arith.constant 0 : index
    %c0_7 = arith.constant 0 : index
    %10 = vector.load %arg3[%c0_6, %c0_7] : memref<1x2xf32, #tpu.memory_space<vmem>>, vector<1x2xf32>
    %11 = arith.addf %9, %10 : vector<1x2xf32>
    %cst_8 = arith.constant 0.000000e+00 : f32
    %12 = vector.broadcast %cst_8 : f32 to vector<1x2xf32>
    %13 = arith.maximumf %11, %12 : vector<1x2xf32>
    %14 = vector.shape_cast %13 : vector<1x2xf32> to vector<1x1x2xf32>
    %c0_9 = arith.constant 0 : index
    %c0_10 = arith.constant 0 : index
    %15 = vector.load %arg4[%c0_9, %c0_10] : memref<16x2xf32, #tpu.memory_space<vmem>>, vector<16x2xf32>
    %16 = vector.shape_cast %15 : vector<16x2xf32> to vector<1x16x2xf32>
    %17 = vector.broadcast %14 : vector<1x1x2xf32> to vector<1x16x2xf32>
    %18 = arith.mulf %17, %16 : vector<1x16x2xf32>
    %cst_11 = arith.constant dense<0.000000e+00> : vector<1x16xf32>
    %19 = vector.multi_reduction <add>, %18, %cst_11 [2] : vector<1x16x2xf32> to vector<1x16xf32>
    %c0_12 = arith.constant 0 : index
    %c0_13 = arith.constant 0 : index
    %20 = vector.load %arg5[%c0_12, %c0_13] : memref<1x16xf32, #tpu.memory_space<vmem>>, vector<1x16xf32>
    %21 = arith.addf %19, %20 : vector<1x16xf32>
    %22 = arith.negf %21 : vector<1x16xf32>
    %23 = math.exp %22 : vector<1x16xf32>
    %cst_14 = arith.constant 1.000000e+00 : f32
    %24 = vector.broadcast %cst_14 : f32 to vector<1x16xf32>
    %25 = arith.addf %24, %23 : vector<1x16xf32>
    %26 = arith.divf %24, %25 : vector<1x16xf32>
    %c0_15 = arith.constant 0 : index
    %c0_16 = arith.constant 0 : index
    %c0_17 = arith.constant 0 : index
    %27 = vector.load %arg1[%c0_15, %c0_16, %c0_17] : memref<1x16x256xf32, #tpu.memory_space<vmem>>, vector<1x16x256xf32>
    %28 = vector.shape_cast %26 : vector<1x16xf32> to vector<1x16x1xf32>
    %cst_18 = arith.constant 1.000000e+00 : f32
    %29 = vector.broadcast %cst_18 : f32 to vector<1x16x1xf32>
    %30 = arith.addf %29, %28 : vector<1x16x1xf32>
    %31 = vector.broadcast %30 : vector<1x16x1xf32> to vector<1x16x256xf32>
    %32 = arith.mulf %27, %31 : vector<1x16x256xf32>
    %c0_19 = arith.constant 0 : index
    %c0_20 = arith.constant 0 : index
    %c0_21 = arith.constant 0 : index
    %33 = vector.load %arg6[%c0_19, %c0_20, %c0_21] : memref<1x16x256xf32, #tpu.memory_space<vmem>>, vector<1x16x256xf32>
    tpu.vector_store %arg6[%c0_19, %c0_20, %c0_21], %32 {strides = array<i32>} : memref<1x16x256xf32, #tpu.memory_space<vmem>>, vector<1x16x256xf32>,
    return
  }
  func.func @transform_0(%arg0: i32) -> (i32, i32, i32) {
    %c0_i32 = arith.constant 0 : i32
    %c0_i32_0 = arith.constant 0 : i32
    %c0_i32_1 = arith.constant 0 : i32
    return %arg0, %c0_i32, %c0_i32_0 : i32, i32, i32
  }
  func.func @transform_1(%arg0: i32) -> (i32, i32) {
    %c0_i32 = arith.constant 0 : i32
    %c0_i32_0 = arith.constant 0 : i32
    %c0_i32_1 = arith.constant 0 : i32
    return %c0_i32, %c0_i32_0 : i32, i32
  }
  func.func @transform_2(%arg0: i32) -> (i32, i32) {
    %c0_i32 = arith.constant 0 : i32
    %c0_i32_0 = arith.constant 0 : i32
    %c0_i32_1 = arith.constant 0 : i32
    return %c0_i32, %c0_i32_0 : i32, i32
  }
  func.func @transform_3(%arg0: i32) -> (i32, i32) {
    %c0_i32 = arith.constant 0 : i32
    %c0_i32_0 = arith.constant 0 : i32
    %c0_i32_1 = arith.constant 0 : i32
    return %c0_i32, %c0_i32_0 : i32, i32
  }
  func.func @transform_4(%arg0: i32) -> (i32, i32) {
    %c0_i32 = arith.constant 0 : i32
    %c0_i32_0 = arith.constant 0 : i32
    %c0_i32_1 = arith.constant 0 : i32
    return %c0_i32, %c0_i32_0 : i32, i32
  }
  func.func @transform_5(%arg0: i32) -> (i32, i32, i32) {
    %c0_i32 = arith.constant 0 : i32
    %c0_i32_0 = arith.constant 0 : i32
    %c0_i32_1 = arith.constant 0 : i32
    return %arg0, %c0_i32, %c0_i32_0 : i32, i32, i32
  }
}

</mosaic_0001>

<llo_original>
// kernel: tpu_custom_call.1
$region0: #{tpu_custom_call.1}
  #allocation0 [shape = 'u32[]', space=smem, size = 0x4, offset = 0x4, fixed_abs, tag = 'smem constant byte address 0x4 - core index']
  #allocation1 [shape = 'u32[144,128]{1,0:T(1,128)}', space=vmem, size = 0x12000, scoped, tag = 'internal scratch']
  %s0 = inlined_call_operand.hbm [shape: f32[2,16,256], index: 0, kind: input, shape index: {}]
  %s1 = inlined_call_operand.vmem [shape: f32[2,16], index: 1, kind: input, shape index: {}]
  %s2 = inlined_call_operand.vmem [shape: f32[1,2], index: 2, kind: input, shape index: {}]
  %s3 = inlined_call_operand.vmem [shape: f32[16,2], index: 3, kind: input, shape index: {}]
  %s4 = inlined_call_operand.vmem [shape: f32[1,16], index: 4, kind: input, shape index: {}]
  %s5 = inlined_call_operand.hbm [shape: f32[2,16,256], index: 5, kind: output, shape index: {}]
  %s6 = sld [smem:[#allocation0]]
  $region57: #{tpu_custom_call.1} parent=0
    _
  %s8 = ssub.s32 1, %s6
  %s9 = scalar_select 0, %s8, %s6
  $region1: #{tpu_custom_call.1} parent=0
    #allocation2 [shape = 'u8[32768]{0}', space=vmem, size = 0x8000, scoped, tag = 'input window, operand 0']
    #allocation3 [shape = 's32[2]{0}', space=sflag, size = 0x8, scoped, tag = 'scoped memory for tpu_custom_call.1']
    #allocation4 [shape = 's32[2]{0}', space=sflag, size = 0x8, scoped, tag = 'scoped memory for tpu_custom_call.1']
    #allocation5 [shape = 'u8[32768]{0}', space=vmem, size = 0x8000, scoped, tag = 'output window, operand 0']
    %10 = vsyncpa [#allocation3], 0
    %s11 = scalar_lea.sflag [#allocation3], 1
    %12 = vsyncpa %s11, 0
    %13 = vsyncpa [#allocation4], 0
    %s14 = scalar_lea.sflag [#allocation4], 1
    %15 = vsyncpa %s14, 0
    loop: start=0, step=1, limit=4
    $region2: #{tpu_custom_call.1} parent=1 // loop_pre_header
      _
    $region3: #{tpu_custom_call.1} parent=1 // loop_header
      %s17 = sphi 0, %s21
      %p18 = scmp.ge.s32.totalorder %s17, 4
      %s27 = sphi 0, %s29
      %s30 = sphi 0, %s27
      %s31 = sphi 0, %s30
      %s47 = sphi 0, %s31
      %s51 = sphi 0, %s51
      %s53 = sphi 0, %s51
      %s54 = sphi 0, %s53
      %s68 = sphi 0, %s54
      %s72 = sphi 0, %s72
      %s74 = sphi 0, %s72
      %s75 = sphi 0, %s74
      %s89 = sphi 0, %s75
      %s93 = sphi 0, %s93
      %s95 = sphi 0, %s93
      %s96 = sphi 0, %s95
      %s110 = sphi 0, %s96
      %s114 = sphi 0, %s114
      %s116 = sphi 0, %s114
      %s117 = sphi 0, %s116
      %s131 = sphi 0, %s117
      %s137 = sphi 0, %s139
      %s140 = sphi 0, %s137
      %s141 = sphi 0, %s140
      %s157 = sphi 0, %s141
    $region4: #{tpu_custom_call.1} parent=1 // loop_header_branch
      %20 = sbr.rel (%p18) target = $region8
    $region5: #{tpu_custom_call.1} parent=1 // loop_body
      %s22 = ssub.s32 %s17, 1
      %s23 = ssub.s32 %s17, 2
      %s24 = sadd.s32 %s17, 1
      %s25 = ssub.s32 %s17, %s24
      %p26 = scmp.eq.s32.totalorder %s25, 0
      %s28 = sadd.s32 %s27, 1
      %s29 = scalar_select %p26, %s27, %s28
      %p32 = pneg %p26
      %p33 = scmp.eq.s32.totalorder %s17, 1
      %p34 = por %p32, %p33
      %p35 = scmp.ne.s32.totalorder %s27, %s30
      %p36 = scmp.eq.s32.totalorder %s17, 0
      %p37 = por %p35, %p36
      %p38 = scmp.ne.s32.totalorder %s27, %s30
      %p39 = scmp.eq.s32.totalorder %s22, 1
      %p40 = por %p38, %p39
      %p41 = scmp.ne.s32.totalorder %s30, %s31
      %p42 = scmp.eq.s32.totalorder %s22, 0
      %p43 = por %p41, %p42
      %p44 = scmp.ne.s32.totalorder %s30, %s31
      %p45 = scmp.eq.s32.totalorder %s23, 1
      %p46 = por %p44, %p45
      %p48 = scmp.ne.s32.totalorder %s31, %s47
      %p49 = scmp.eq.s32.totalorder %s23, 0
      %p50 = por %p48, %p49
      %s52 = sadd.s32 %s51, 1
      %p55 = scmp.eq.s32.totalorder %s17, 1
      %p56 = scmp.ne.s32.totalorder %s51, %s53
      %p57 = scmp.eq.s32.totalorder %s17, 0
      %p58 = por %p56, %p57
      %p59 = scmp.ne.s32.totalorder %s51, %s53
      %p60 = scmp.eq.s32.totalorder %s22, 1
      %p61 = por %p59, %p60
      %p62 = scmp.ne.s32.totalorder %s53, %s54
      %p63 = scmp.eq.s32.totalorder %s22, 0
      %p64 = por %p62, %p63
      %p65 = scmp.ne.s32.totalorder %s53, %s54
      %p66 = scmp.eq.s32.totalorder %s23, 1
      %p67 = por %p65, %p66
      %p69 = scmp.ne.s32.totalorder %s54, %s68
      %p70 = scmp.eq.s32.totalorder %s23, 0
      %p71 = por %p69, %p70
      %s73 = sadd.s32 %s72, 1
      %p76 = scmp.eq.s32.totalorder %s17, 1
      %p77 = scmp.ne.s32.totalorder %s72, %s74
      %p78 = scmp.eq.s32.totalorder %s17, 0
      %p79 = por %p77, %p78
      %p80 = scmp.ne.s32.totalorder %s72, %s74
      %p81 = scmp.eq.s32.totalorder %s22, 1
      %p82 = por %p80, %p81
      %p83 = scmp.ne.s32.totalorder %s74, %s75
      %p84 = scmp.eq.s32.totalorder %s22, 0
      %p85 = por %p83, %p84
      %p86 = scmp.ne.s32.totalorder %s74, %s75
      %p87 = scmp.eq.s32.totalorder %s23, 1
      %p88 = por %p86, %p87
      %p90 = scmp.ne.s32.totalorder %s75, %s89
      %p91 = scmp.eq.s32.totalorder %s23, 0
      %p92 = por %p90, %p91
      %s94 = sadd.s32 %s93, 1
      %p97 = scmp.eq.s32.totalorder %s17, 1
      %p98 = scmp.ne.s32.totalorder %s93, %s95
      %p99 = scmp.eq.s32.totalorder %s17, 0
      %p100 = por %p98, %p99
      %p101 = scmp.ne.s32.totalorder %s93, %s95
      %p102 = scmp.eq.s32.totalorder %s22, 1
      %p103 = por %p101, %p102
      %p104 = scmp.ne.s32.totalorder %s95, %s96
      %p105 = scmp.eq.s32.totalorder %s22, 0
      %p106 = por %p104, %p105
      %p107 = scmp.ne.s32.totalorder %s95, %s96
      %p108 = scmp.eq.s32.totalorder %s23, 1
      %p109 = por %p107, %p108
      %p111 = scmp.ne.s32.totalorder %s96, %s110
      %p112 = scmp.eq.s32.totalorder %s23, 0
      %p113 = por %p111, %p112
      %s115 = sadd.s32 %s114, 1
      %p118 = scmp.eq.s32.totalorder %s17, 1
      %p119 = scmp.ne.s32.totalorder %s114, %s116
      %p120 = scmp.eq.s32.totalorder %s17, 0
      %p121 = por %p119, %p120
      %p122 = scmp.ne.s32.totalorder %s114, %s116
      %p123 = scmp.eq.s32.totalorder %s22, 1
      %p124 = por %p122, %p123
      %p125 = scmp.ne.s32.totalorder %s116, %s117
      %p126 = scmp.eq.s32.totalorder %s22, 0
      %p127 = por %p125, %p126
      %p128 = scmp.ne.s32.totalorder %s116, %s117
      %p129 = scmp.eq.s32.totalorder %s23, 1
      %p130 = por %p128, %p129
      %p132 = scmp.ne.s32.totalorder %s117, %s131
      %p133 = scmp.eq.s32.totalorder %s23, 0
      %p134 = por %p132, %p133
      %s135 = ssub.s32 %s17, %s24
      %p136 = scmp.eq.s32.totalorder %s135, 0
      %s138 = sadd.s32 %s137, 1
      %s139 = scalar_select %p136, %s137, %s138
      %p142 = pneg %p136
      %p143 = scmp.eq.s32.totalorder %s17, 1
      %p144 = por %p142, %p143
      %p145 = scmp.ne.s32.totalorder %s137, %s140
      %p146 = scmp.eq.s32.totalorder %s17, 0
      %p147 = por %p145, %p146
      %p148 = scmp.ne.s32.totalorder %s137, %s140
      %p149 = scmp.eq.s32.totalorder %s22, 1
      %p150 = por %p148, %p149
      %p151 = scmp.ne.s32.totalorder %s140, %s141
      %p152 = scmp.eq.s32.totalorder %s22, 0
      %p153 = por %p151, %p152
      %p154 = scmp.ne.s32.totalorder %s140, %s141
      %p155 = scmp.eq.s32.totalorder %s23, 1
      %p156 = por %p154, %p155
      %p158 = scmp.ne.s32.totalorder %s141, %s157
      %p159 = scmp.eq.s32.totalorder %s23, 0
      %p160 = por %p158, %p159
      %p161 = scmp.le.s32.totalorder 1, %s17
      %p162 = scmp.lt.s32.totalorder %s17, 3
      %p163 = pnand %p161, %p162
      %p164 = pneg %p163
      // Predicated region
      $region9: #{tpu_custom_call.1} parent=5 // pred_check
        _
      $region10: #{tpu_custom_call.1} parent=5 // pred_check_branch
        %166 = sbr.rel (%p163) target = $region12
      $region11: #{tpu_custom_call.1} parent=5 // pred_region
        %s167 = ssub.s32 %s17, 1
        // Predicated region
        $region13: #{tpu_custom_call.1} parent=11 // pred_check
          %p168 = pneg %p64
        $region14: #{tpu_custom_call.1} parent=11 // pred_check_branch
          %170 = sbr.rel (%p168) target = $region16
        $region15: #{tpu_custom_call.1} parent=11 // pred_region
          _
        $region16: #{tpu_custom_call.1} parent=11 // pred_fallthru
          _
        // Predicated region
        $region17: #{tpu_custom_call.1} parent=11 // pred_check
          %p171 = pneg %p85
        $region18: #{tpu_custom_call.1} parent=11 // pred_check_branch
          %173 = sbr.rel (%p171) target = $region20
        $region19: #{tpu_custom_call.1} parent=11 // pred_region
          _
        $region20: #{tpu_custom_call.1} parent=11 // pred_fallthru
          _
        // Predicated region
        $region21: #{tpu_custom_call.1} parent=11 // pred_check
          %p174 = pneg %p106
        $region22: #{tpu_custom_call.1} parent=11 // pred_check_branch
          %176 = sbr.rel (%p174) target = $region24
        $region23: #{tpu_custom_call.1} parent=11 // pred_region
          _
        $region24: #{tpu_custom_call.1} parent=11 // pred_fallthru
          _
        // Predicated region
        $region25: #{tpu_custom_call.1} parent=11 // pred_check
          %p177 = pneg %p127
        $region26: #{tpu_custom_call.1} parent=11 // pred_check_branch
          %179 = sbr.rel (%p177) target = $region28
        $region27: #{tpu_custom_call.1} parent=11 // pred_region
          _
        $region28: #{tpu_custom_call.1} parent=11 // pred_fallthru
          _
      $region12: #{tpu_custom_call.1} parent=5 // pred_fallthru
        _
      %p180 = scmp.lt.s32.totalorder %s17, 2
      // Predicated region
      $region29: #{tpu_custom_call.1} parent=5 // pred_check
        %p181 = pneg %p180
      $region30: #{tpu_custom_call.1} parent=5 // pred_check_branch
        %183 = sbr.rel (%p181) target = $region32
      $region31: #{tpu_custom_call.1} parent=5 // pred_region
        // Predicated region
        $region33: #{tpu_custom_call.1} parent=31 // pred_check
          %p184 = pneg %p37
        $region34: #{tpu_custom_call.1} parent=31 // pred_check_branch
          %186 = sbr.rel (%p184) target = $region36
        $region35: #{tpu_custom_call.1} parent=31 // pred_region
          %s187 = sand.u32 %s27, 1
          %s188 = scalar_lea.sflag [#allocation3], %s187
          %s189 = sand.u32 %s27, 1
          %s190 = smul.addr %s189, 32
          %s191 = scalar_lea.vmem [#allocation2], %s190
          %s193 = ssub.s32 512, 512
          %194 = vsyncadd %s188, %s193
          %s195 = smul.addr %s17, 4
          %s196 = smul.addr %s195, 128
          %s197 = scalar_lea.hbm %s0, %s196
          %s198 = sshll.u32 %s191, 4
          %s199 = int_to_ptr.vmem [resolvable:$true] %s198
          %204 = dma.hbm_to_vmem [thread:$0]  %s197, 512, %s199, %s188, 256, 256, 16
        $region36: #{tpu_custom_call.1} parent=31 // pred_fallthru
          _
      $region32: #{tpu_custom_call.1} parent=5 // pred_fallthru
        _
      %p205 = scmp.le.s32.totalorder 1, %s17
      %p206 = scmp.lt.s32.totalorder %s17, 3
      %p207 = pnand %p205, %p206
      %p208 = pneg %p207
      // Predicated region
      $region37: #{tpu_custom_call.1} parent=5 // pred_check
        _
      $region38: #{tpu_custom_call.1} parent=5 // pred_check_branch
        %210 = sbr.rel (%p207) target = $region40
      $region39: #{tpu_custom_call.1} parent=5 // pred_region
        %s211 = ssub.s32 %s17, 1
        %s212 = sand.u32 %s30, 1
        %s213 = scalar_lea.sflag [#allocation3], %s212
        %s214 = sand.u32 %s30, 1
        %s215 = smul.addr %s214, 32
        %s216 = scalar_lea.vmem [#allocation2], %s215
        // Predicated region
        $region41: #{tpu_custom_call.1} parent=39 // pred_check
          %p217 = pneg %p43
        $region42: #{tpu_custom_call.1} parent=39 // pred_check_branch
          %219 = sbr.rel (%p217) target = $region44
        $region43: #{tpu_custom_call.1} parent=39 // pred_region
          %220 = dma.done %s213, 512
        $region44: #{tpu_custom_call.1} parent=39 // pred_fallthru
          _
        %s221 = sand.u32 %s30, 1
        %s222 = scalar_lea.sflag [#allocation3], %s221
        %s223 = sand.u32 %s30, 1
        %s224 = smul.addr %s223, 32
        %s225 = scalar_lea.vmem [#allocation2], %s224
        %p226 = pneg %p43
        %p227 = pneg %p40
        %p228 = pneg %p64
        %p229 = pneg %p61
        %p230 = pneg %p85
        %p231 = pneg %p82
        %p232 = pneg %p106
        %p233 = pneg %p103
        %p234 = pneg %p127
        %p235 = pneg %p124
        %p236 = pneg %p153
        %p237 = pneg %p150
        %s238 = sand.u32 %s140, 1
        %s239 = scalar_lea.sflag [#allocation4], %s238
        %s240 = sand.u32 %s140, 1
        %s241 = smul.addr %s240, 32
        %s242 = scalar_lea.vmem [#allocation5], %s241
        %v243 = vld [vmem:[%s216] sm:$0xff]
        %v244 = vld [vmem:[%s216 + $0x8] sm:$0xff]
        %v245 = vld [vmem:[%s216 + $0x10] sm:$0xff]
        %v246 = vld [vmem:[%s216 + $0x18] sm:$0xff]
        %v247 = vadd.f32 %v243, %v244
        %248 = vadd.xlane.f32.xlu0 %v247
        %v249 = vpop.xlane.xlu0 %248
        %v250 = vadd.f32 %v245, %v246
        %251 = vadd.xlane.f32.xlu0 %v250
        %v252 = vpop.xlane.xlu0 %251
        %v253 = vmul.f32 %v249, 0.00390625
        %v254 = vmul.f32 %v252, 0.00390625
        %v255 = vld [vmem:[%s1] sm:$0x3]
        %v257 = vlaneseq
        %v258 = vshrl.u32 %v257, 7
        %v259 = vsub.s32 0, %v258
        %v260 = vrot.slane %v255, %v259
        %262 = vbcast.lane.b32.xlu0 %v260, 256
        %v263 = vpop.permute.xlu0 %262
        %s265 = sor.u32 256, 8
        %266 = vbcast.lane.b32.xlu0 %v260, %s265
        %v267 = vpop.permute.xlu0 %266
        %v268 = vlaneseq
        %v269 = vshrl.u32 %v268, 7
        %v270 = vsub.s32 1, %v269
        %v271 = vrot.slane %v255, %v270
        %273 = vbcast.lane.b32.xlu0 %v271, 256
        %v274 = vpop.permute.xlu0 %273
        %s276 = sor.u32 256, 8
        %277 = vbcast.lane.b32.xlu0 %v271, %s276
        %v278 = vpop.permute.xlu0 %277
        %v283 = vmul.f32 %v253, %v263
        %v284 = vmul.f32 %v254, %v267
        %v285 = vmul.f32 %v253, %v274
        %v286 = vmul.f32 %v254, %v278
        %291 = vset.pattern.permute.xlu0 0
        %292 = vperm.xlu0 %291, %v283
        %v293 = vpop.permute.xlu0 %292
        %294 = vset.pattern.permute.xlu0 0
        %295 = vperm.xlu0 %294, %v284
        %v296 = vpop.permute.xlu0 %295
        %297 = vset.pattern.permute.xlu0 0
        %298 = vperm.xlu0 %297, %v285
        %v299 = vpop.permute.xlu0 %298
        %300 = vset.pattern.permute.xlu0 0
        %301 = vperm.xlu0 %300, %v286
        %v302 = vpop.permute.xlu0 %301
        %v303 = vlaneseq
        %v304 = vand.u32 %v303, 127
        %v305 = vlaneseq
        %v306 = vshrl.u32 %v305, 7
        %v307 = vsub.s32 %v304, %v306
        %v308 = vrot.slane %v293, %v307
        %v309 = vadd.s32 %v304, 4294967288
        %v310 = vlaneseq
        %v311 = vshrl.u32 %v310, 7
        %v312 = vsub.s32 %v309, %v311
        %v313 = vrot.slane %v296, %v312
        %vm314 = vcmask 130112
        %v315 = vsel %vm314, %v313, %v308
        %v316 = vlaneseq
        %v317 = vshrl.u32 %v316, 7
        %v318 = vsub.s32 %v304, %v317
        %v319 = vrot.slane %v299, %v318
        %v320 = vlaneseq
        %v321 = vshrl.u32 %v320, 7
        %v322 = vsub.s32 %v309, %v321
        %v323 = vrot.slane %v302, %v322
        %v324 = vsel %vm314, %v323, %v319
        %vm325 = vcmask 1041409
        %v326 = vsel %vm325, %v324, %v315
        %vm328 = vcmask 123904
        %v329 = vsel %vm328, %v326, 0.0
        %330 = vadd.xlane.f32.xlu0 %v329
        %v331 = vpop.xlane.xlu0 %330
        %v332 = vld [vmem:[%s2] sm:$0x1]
        %v334 = vlaneseq
        %v335 = vshrl.u32 %v334, 7
        %v336 = vsub.s32 0, %v335
        %v337 = vrot.slane %v332, %v336
        %339 = vbcast.lane.b32.xlu0 %v337, 256
        %v340 = vpop.permute.xlu0 %339
        %v342 = vadd.f32 %v331, %v340
        %v343 = vmax.f32 %v342, 0.0
        %v344 = vld [vmem:[%s3] sm:$0xff]
        %v345 = vld [vmem:[%s3 + $0x8] sm:$0xff]
        %v348 = vlaneseq
        %v349 = vshrl.u32 %v348, 7
        %v350 = vsub.s32 0, %v349
        %v351 = vrot.slane %v344, %v350
        %353 = vbcast.lane.b32.xlu0 %v351, 256
        %v354 = vpop.permute.xlu0 %353
        %v355 = vlaneseq
        %v356 = vshrl.u32 %v355, 7
        %v357 = vsub.s32 1, %v356
        %v358 = vrot.slane %v344, %v357
        %360 = vbcast.lane.b32.xlu0 %v358, 256
        %v361 = vpop.permute.xlu0 %360
        %v362 = vlaneseq
        %v363 = vshrl.u32 %v362, 7
        %v364 = vsub.s32 2, %v363
        %v365 = vrot.slane %v344, %v364
        %367 = vbcast.lane.b32.xlu0 %v365, 256
        %v368 = vpop.permute.xlu0 %367
        %v369 = vlaneseq
        %v370 = vshrl.u32 %v369, 7
        %v371 = vsub.s32 3, %v370
        %v372 = vrot.slane %v344, %v371
        %374 = vbcast.lane.b32.xlu0 %v372, 256
        %v375 = vpop.permute.xlu0 %374
        %v376 = vlaneseq
        %v377 = vshrl.u32 %v376, 7
        %v378 = vsub.s32 4, %v377
        %v379 = vrot.slane %v344, %v378
        %381 = vbcast.lane.b32.xlu0 %v379, 256
        %v382 = vpop.permute.xlu0 %381
        %v383 = vlaneseq
        %v384 = vshrl.u32 %v383, 7
        %v385 = vsub.s32 5, %v384
        %v386 = vrot.slane %v344, %v385
        %388 = vbcast.lane.b32.xlu0 %v386, 256
        %v389 = vpop.permute.xlu0 %388
        %v390 = vlaneseq
        %v391 = vshrl.u32 %v390, 7
        %v392 = vsub.s32 6, %v391
        %v393 = vrot.slane %v344, %v392
        %395 = vbcast.lane.b32.xlu0 %v393, 256
        %v396 = vpop.permute.xlu0 %395
        %v397 = vlaneseq
        %v398 = vshrl.u32 %v397, 7
        %v399 = vsub.s32 7, %v398
        %v400 = vrot.slane %v344, %v399
        %402 = vbcast.lane.b32.xlu0 %v400, 256
        %v403 = vpop.permute.xlu0 %402
        %v404 = vlaneseq
        %v405 = vshrl.u32 %v404, 7
        %v406 = vsub.s32 0, %v405
        %v407 = vrot.slane %v345, %v406
        %409 = vbcast.lane.b32.xlu0 %v407, 256
        %v410 = vpop.permute.xlu0 %409
        %v411 = vlaneseq
        %v412 = vshrl.u32 %v411, 7
        %v413 = vsub.s32 1, %v412
        %v414 = vrot.slane %v345, %v413
        %416 = vbcast.lane.b32.xlu0 %v414, 256
        %v417 = vpop.permute.xlu0 %416
        %v418 = vlaneseq
        %v419 = vshrl.u32 %v418, 7
        %v420 = vsub.s32 2, %v419
        %v421 = vrot.slane %v345, %v420
        %423 = vbcast.lane.b32.xlu0 %v421, 256
        %v424 = vpop.permute.xlu0 %423
        %v425 = vlaneseq
        %v426 = vshrl.u32 %v425, 7
        %v427 = vsub.s32 3, %v426
        %v428 = vrot.slane %v345, %v427
        %430 = vbcast.lane.b32.xlu0 %v428, 256
        %v431 = vpop.permute.xlu0 %430
        %v432 = vlaneseq
        %v433 = vshrl.u32 %v432, 7
        %v434 = vsub.s32 4, %v433
        %v435 = vrot.slane %v345, %v434
        %437 = vbcast.lane.b32.xlu0 %v435, 256
        %v438 = vpop.permute.xlu0 %437
        %v439 = vlaneseq
        %v440 = vshrl.u32 %v439, 7
        %v441 = vsub.s32 5, %v440
        %v442 = vrot.slane %v345, %v441
        %444 = vbcast.lane.b32.xlu0 %v442, 256
        %v445 = vpop.permute.xlu0 %444
        %v446 = vlaneseq
        %v447 = vshrl.u32 %v446, 7
        %v448 = vsub.s32 6, %v447
        %v449 = vrot.slane %v345, %v448
        %451 = vbcast.lane.b32.xlu0 %v449, 256
        %v452 = vpop.permute.xlu0 %451
        %v453 = vlaneseq
        %v454 = vshrl.u32 %v453, 7
        %v455 = vsub.s32 7, %v454
        %v456 = vrot.slane %v345, %v455
        %458 = vbcast.lane.b32.xlu0 %v456, 256
        %v459 = vpop.permute.xlu0 %458
        %v476 = vmul.f32 %v343, %v354
        %v477 = vmul.f32 %v343, %v361
        %v478 = vmul.f32 %v343, %v368
        %v479 = vmul.f32 %v343, %v375
        %v480 = vmul.f32 %v343, %v382
        %v481 = vmul.f32 %v343, %v389
        %v482 = vmul.f32 %v343, %v396
        %v483 = vmul.f32 %v343, %v403
        %v484 = vmul.f32 %v343, %v410
        %v485 = vmul.f32 %v343, %v417
        %v486 = vmul.f32 %v343, %v424
        %v487 = vmul.f32 %v343, %v431
        %v488 = vmul.f32 %v343, %v438
        %v489 = vmul.f32 %v343, %v445
        %v490 = vmul.f32 %v343, %v452
        %v491 = vmul.f32 %v343, %v459
        %508 = vset.pattern.permute.xlu0 0
        %509 = vperm.xlu0 %508, %v476
        %v510 = vpop.permute.xlu0 %509
        %511 = vset.pattern.permute.xlu0 0
        %512 = vperm.xlu0 %511, %v477
        %v513 = vpop.permute.xlu0 %512
        %514 = vset.pattern.permute.xlu0 0
        %515 = vperm.xlu0 %514, %v478
        %v516 = vpop.permute.xlu0 %515
        %517 = vset.pattern.permute.xlu0 0
        %518 = vperm.xlu0 %517, %v479
        %v519 = vpop.permute.xlu0 %518
        %520 = vset.pattern.permute.xlu0 0
        %521 = vperm.xlu0 %520, %v480
        %v522 = vpop.permute.xlu0 %521
        %523 = vset.pattern.permute.xlu0 0
        %524 = vperm.xlu0 %523, %v481
        %v525 = vpop.permute.xlu0 %524
        %526 = vset.pattern.permute.xlu0 0
        %527 = vperm.xlu0 %526, %v482
        %v528 = vpop.permute.xlu0 %527
        %529 = vset.pattern.permute.xlu0 0
        %530 = vperm.xlu0 %529, %v483
        %v531 = vpop.permute.xlu0 %530
        %532 = vset.pattern.permute.xlu0 0
        %533 = vperm.xlu0 %532, %v484
        %v534 = vpop.permute.xlu0 %533
        %535 = vset.pattern.permute.xlu0 0
        %536 = vperm.xlu0 %535, %v485
        %v537 = vpop.permute.xlu0 %536
        %538 = vset.pattern.permute.xlu0 0
        %539 = vperm.xlu0 %538, %v486
        %v540 = vpop.permute.xlu0 %539
        %541 = vset.pattern.permute.xlu0 0
        %542 = vperm.xlu0 %541, %v487
        %v543 = vpop.permute.xlu0 %542
        %544 = vset.pattern.permute.xlu0 0
        %545 = vperm.xlu0 %544, %v488
        %v546 = vpop.permute.xlu0 %545
        %547 = vset.pattern.permute.xlu0 0
        %548 = vperm.xlu0 %547, %v489
        %v549 = vpop.permute.xlu0 %548
        %550 = vset.pattern.permute.xlu0 0
        %551 = vperm.xlu0 %550, %v490
        %v552 = vpop.permute.xlu0 %551
        %553 = vset.pattern.permute.xlu0 0
        %554 = vperm.xlu0 %553, %v491
        %v555 = vpop.permute.xlu0 %554
        %v556 = vlaneseq
        %v557 = vshrl.u32 %v556, 7
        %v558 = vsub.s32 %v304, %v557
        %v559 = vrot.slane %v510, %v558
        %v560 = vlaneseq
        %v561 = vshrl.u32 %v560, 7
        %v562 = vsub.s32 %v304, %v561
        %v563 = vrot.slane %v513, %v562
        %v564 = vlaneseq
        %v565 = vshrl.u32 %v564, 7
        %v566 = vsub.s32 %v304, %v565
        %v567 = vrot.slane %v516, %v566
        %v568 = vlaneseq
        %v569 = vshrl.u32 %v568, 7
        %v570 = vsub.s32 %v304, %v569
        %v571 = vrot.slane %v519, %v570
        %v572 = vlaneseq
        %v573 = vshrl.u32 %v572, 7
        %v574 = vsub.s32 %v304, %v573
        %v575 = vrot.slane %v522, %v574
        %v576 = vlaneseq
        %v577 = vshrl.u32 %v576, 7
        %v578 = vsub.s32 %v304, %v577
        %v579 = vrot.slane %v525, %v578
        %v580 = vlaneseq
        %v581 = vshrl.u32 %v580, 7
        %v582 = vsub.s32 %v304, %v581
        %v583 = vrot.slane %v528, %v582
        %v584 = vlaneseq
        %v585 = vshrl.u32 %v584, 7
        %v586 = vsub.s32 %v304, %v585
        %v587 = vrot.slane %v531, %v586
        %v588 = vlaneseq
        %v589 = vshrl.u32 %v588, 7
        %v590 = vsub.s32 %v304, %v589
        %v591 = vrot.slane %v534, %v590
        %v592 = vlaneseq
        %v593 = vshrl.u32 %v592, 7
        %v594 = vsub.s32 %v304, %v593
        %v595 = vrot.slane %v537, %v594
        %v596 = vlaneseq
        %v597 = vshrl.u32 %v596, 7
        %v598 = vsub.s32 %v304, %v597
        %v599 = vrot.slane %v540, %v598
        %v600 = vlaneseq
        %v601 = vshrl.u32 %v600, 7
        %v602 = vsub.s32 %v304, %v601
        %v603 = vrot.slane %v543, %v602
        %v604 = vlaneseq
        %v605 = vshrl.u32 %v604, 7
        %v606 = vsub.s32 %v304, %v605
        %v607 = vrot.slane %v546, %v606
        %v608 = vlaneseq
        %v609 = vshrl.u32 %v608, 7
        %v610 = vsub.s32 %v304, %v609
        %v611 = vrot.slane %v549, %v610
        %v612 = vlaneseq
        %v613 = vshrl.u32 %v612, 7
        %v614 = vsub.s32 %v304, %v613
        %v615 = vrot.slane %v552, %v614
        %v616 = vlaneseq
        %v617 = vshrl.u32 %v616, 7
        %v618 = vsub.s32 %v304, %v617
        %v619 = vrot.slane %v555, %v618
        %v620 = vsel %vm325, %v563, %v559
        %vm621 = vcmask 1042434
        %v622 = vsel %vm621, %v567, %v620
        %vm623 = vcmask 1043459
        %v624 = vsel %vm623, %v571, %v622
        %vm625 = vcmask 1044484
        %v626 = vsel %vm625, %v575, %v624
        %vm627 = vcmask 1045509
        %v628 = vsel %vm627, %v579, %v626
        %vm629 = vcmask 1046534
        %v630 = vsel %vm629, %v583, %v628
        %vm631 = vcmask 1047559
        %v632 = vsel %vm631, %v587, %v630
        %v633 = vsel %vm325, %v595, %v591
        %v634 = vsel %vm621, %v599, %v633
        %v635 = vsel %vm623, %v603, %v634
        %v636 = vsel %vm625, %v607, %v635
        %v637 = vsel %vm627, %v611, %v636
        %v638 = vsel %vm629, %v615, %v637
        %v639 = vsel %vm631, %v619, %v638
        %vm642 = vcmask 15360
        %v643 = vsel %vm642, %v632, 0.0
        %644 = vadd.xlane.f32.xlu0 %v643
        %v645 = vpop.xlane.xlu0 %644
        %v646 = vsel %vm642, %v639, 0.0
        %647 = vadd.xlane.f32.xlu0 %v646
        %v648 = vpop.xlane.xlu0 %647
        %v649 = vld [vmem:[%s4] sm:$0x1]
        %v651 = vlaneseq
        %v652 = vshrl.u32 %v651, 7
        %v653 = vsub.s32 0, %v652
        %v654 = vrot.slane %v649, %v653
        %656 = vbcast.lane.b32.xlu0 %v654, 256
        %v657 = vpop.permute.xlu0 %656
        %s659 = sor.u32 256, 8
        %660 = vbcast.lane.b32.xlu0 %v654, %s659
        %v661 = vpop.permute.xlu0 %660
        %v664 = vadd.f32 %v645, %v657
        %v665 = vadd.f32 %v648, %v661
        %v666 = vxor.u32 %v664, 2147483648
        %v667 = vxor.u32 %v665, 2147483648
        %v668 = vmul.f32 %v666, 1.442695
        %v669 = vpow.pop %v668
        %v670 = vmul.f32 %v667, 1.442695
        %v671 = vpow.pop %v670
        %v672 = vadd.f32 %v669, 1.0
        %v673 = vadd.f32 %v671, 1.0
        %v674 = vrcp.pop %v672
        %v675 = vmul.f32 1.0, %v674
        %v676 = vrcp.pop %v673
        %v677 = vmul.f32 1.0, %v676
        %v678 = vadd.f32 %v675, 1.0
        %v679 = vadd.f32 %v677, 1.0
        %681 = vset.pattern.permute.xlu0 0
        %682 = vperm.xlu0 %681, %v678
        %v683 = vpop.permute.xlu0 %682
        %686 = vset.pattern.permute.xlu0 0
        %687 = vperm.xlu0 %686, %v679
        %v688 = vpop.permute.xlu0 %687
        %v690 = vmul.f32 %v243, %v683
        %v691 = vmul.f32 %v244, %v683
        %v692 = vmul.f32 %v245, %v688
        %v693 = vmul.f32 %v246, %v688
        %694 = vst [vmem:[%s242] sm:$0xff] %v690
        %695 = vst [vmem:[%s242 + $0x8] sm:$0xff] %v691
        %696 = vst [vmem:[%s242 + $0x10] sm:$0xff] %v692
        %697 = vst [vmem:[%s242 + $0x18] sm:$0xff] %v693
        %s698 = sand.u32 %s140, 1
        %s699 = scalar_lea.sflag [#allocation4], %s698
        %s700 = sand.u32 %s140, 1
        %s701 = smul.addr %s700, 32
        %s702 = scalar_lea.vmem [#allocation5], %s701
        // Predicated region
        $region45: #{tpu_custom_call.1} parent=39 // pred_check
          %p703 = pneg %p150
        $region46: #{tpu_custom_call.1} parent=39 // pred_check_branch
          %705 = sbr.rel (%p703) target = $region48
        $region47: #{tpu_custom_call.1} parent=39 // pred_region
          %s707 = ssub.s32 512, 512
          %708 = vsyncadd %s699, %s707
          %s709 = smul.addr %s22, 4
          %s710 = smul.addr %s709, 128
          %s711 = scalar_lea.hbm %s5, %s710
          %s712 = sshll.u32 %s702, 4
          %s713 = int_to_ptr.vmem [resolvable:$true] %s712
          %718 = dma.vmem_to_hbm [thread:$0]  %s713, 512, %s711, %s699, 256, 256, 16
        $region48: #{tpu_custom_call.1} parent=39 // pred_fallthru
          _
      $region40: #{tpu_custom_call.1} parent=5 // pred_fallthru
        _
      %p719 = scmp.le.s32.totalorder 2, %s17
      // Predicated region
      $region49: #{tpu_custom_call.1} parent=5 // pred_check
        %p720 = pneg %p719
      $region50: #{tpu_custom_call.1} parent=5 // pred_check_branch
        %722 = sbr.rel (%p720) target = $region52
      $region51: #{tpu_custom_call.1} parent=5 // pred_region
        %s723 = ssub.s32 %s17, 2
        // Predicated region
        $region53: #{tpu_custom_call.1} parent=51 // pred_check
          %p724 = pneg %p156
        $region54: #{tpu_custom_call.1} parent=51 // pred_check_branch
          %726 = sbr.rel (%p724) target = $region56
        $region55: #{tpu_custom_call.1} parent=51 // pred_region
          %s727 = sand.u32 %s141, 1
          %s728 = scalar_lea.sflag [#allocation4], %s727
          %s729 = sand.u32 %s141, 1
          %s730 = smul.addr %s729, 32
          %s731 = scalar_lea.vmem [#allocation5], %s730
          %732 = dma.done %s728, 512
        $region56: #{tpu_custom_call.1} parent=51 // pred_fallthru
          _
      $region52: #{tpu_custom_call.1} parent=5 // pred_fallthru
        _
    $region6: #{tpu_custom_call.1} parent=1 // loop_footer
      %s21 = sadd.s32 1, %s17
    $region7: #{tpu_custom_call.1} parent=1 // loop_footer_branch
      %16 = sbr.rel target = $region3
    $region8: #{tpu_custom_call.1} parent=1 // loop_exit
      _
    %733 = vsyncpa [#allocation3], 1
    %s734 = scalar_lea.sflag [#allocation3], 1
    %735 = vsyncpa %s734, 1
    %736 = vsyncpa [#allocation4], 1
    %s737 = scalar_lea.sflag [#allocation4], 1
    %738 = vsyncpa %s737, 1

</llo_original>
